<compile_context>
chip_gen: v7x
topology: tpu7x:2x2x1
jax: 0.10.0
libtpu: 0.0.40
codegen_flags: <defaults>
</compile_context>

<pallas_src>
import functools

import jax
import jax.numpy as jnp
from jax.experimental import pallas as pl
from jax.experimental.pallas import tpu as pltpu


def _round_up(x: int, m: int) -> int:
    return ((x + m - 1) // m) * m


def _mlp_kernel(x_ref, w1_ref, b1_ref, w2_ref, b2_ref, o_ref):
    # Fused: matmul -> bias -> relu -> matmul -> bias, f32 accumulation on MXU.
    x = x_ref[...]                                                        # (TB, in)  bf16
    h = jnp.dot(x, w1_ref[...], preferred_element_type=jnp.float32)      # (TB, Hp)  f32
    h = jnp.maximum(h + b1_ref[...], 0.0)                                 # bias + ReLU in f32
    h = h.astype(w2_ref.dtype)                                            # back to bf16 for MXU
    y = jnp.dot(h, w2_ref[...], preferred_element_type=jnp.float32)      # (TB, Op)  f32
    y = y + b2_ref[...]
    o_ref[...] = y.astype(o_ref.dtype)


@functools.partial(jax.jit, static_argnames=("block_b", "compute_dtype"))
def linear_qnet_forward(x, w1_t, b1, w2_t, b2, *, block_b=512,
                        compute_dtype=jnp.bfloat16):
    """Forward pass of Linear_QNet.

    x: (B, in), w1_t: (in, hid), b1: (1, hid), w2_t: (hid, out), b2: (1, out).
    Returns (B, out) float32.
    """
    B, in_size = x.shape
    hid = w1_t.shape[1]
    out_size = w2_t.shape[1]

    # Lane-dense padding targets (multiples of 128 work for v5e/v6e/v7x MXU & vregs).
    H_pad = _round_up(hid, 128)
    O_pad = _round_up(out_size, 128)

    # Batch tile: large for throughput, but no bigger than the (8-aligned) batch.
    TB = min(block_b, _round_up(B, 8))
    B_pad = _round_up(B, TB)

    # Zero-padded, casted operands. Zero padding is exact: padded hidden columns
    # produce ReLU(0) = 0 and contribute nothing to the second matmul; padded
    # output columns are sliced off below.
    x_p = jnp.zeros((B_pad, in_size), compute_dtype).at[:B].set(x.astype(compute_dtype))
    w1_p = jnp.zeros((in_size, H_pad), compute_dtype).at[:, :hid].set(
        w1_t.astype(compute_dtype))
    b1_p = jnp.zeros((1, H_pad), jnp.float32).at[:, :hid].set(b1.astype(jnp.float32))
    w2_p = jnp.zeros((H_pad, O_pad), compute_dtype).at[:hid, :out_size].set(
        w2_t.astype(compute_dtype))
    b2_p = jnp.zeros((1, O_pad), jnp.float32).at[:, :out_size].set(b2.astype(jnp.float32))

    grid = (B_pad // TB,)

    out_padded = pl.pallas_call(
        _mlp_kernel,
        out_shape=jax.ShapeDtypeStruct((B_pad, O_pad), jnp.float32),
        grid_spec=pltpu.PrefetchScalarGridSpec(
            num_scalar_prefetch=0,
            grid=grid,
            in_specs=[
                # x: batch-tiled, double-buffered by the auto-pipeline.
                pl.BlockSpec((TB, in_size), lambda i: (i, 0)),
                # Weights / biases: constant block index -> DMA'd once, VMEM-resident.
                pl.BlockSpec((in_size, H_pad), lambda i: (0, 0)),
                pl.BlockSpec((1, H_pad), lambda i: (0, 0)),
                pl.BlockSpec((H_pad, O_pad), lambda i: (0, 0)),
                pl.BlockSpec((1, O_pad), lambda i: (0, 0)),
            ],
            out_specs=pl.BlockSpec((TB, O_pad), lambda i: (i, 0)),
        ),
        compiler_params=pltpu.CompilerParams(
            dimension_semantics=("parallel",),       # shard batch tiles across TCs (v7x)
            vmem_limit_bytes=32 * 1024 * 1024,       # plenty of headroom; fits v7x's 64 MiB
        ),
    )(x_p, w1_p, b1_p, w2_p, b2_p)

    return out_padded[:B, :out_size]


def init_params(key, input_size, hidden_size, output_size):
    """Deterministic init matching PyTorch nn.Linear's default U(-1/sqrt(fan_in), .)."""
    k1, k2, k3, k4 = jax.random.split(key, 4)
    bound1 = 1.0 / jnp.sqrt(input_size)
    bound2 = 1.0 / jnp.sqrt(hidden_size)
    # PyTorch stores weight as (out, in); generate that way then transpose for the kernel.
    w1 = jax.random.uniform(k1, (hidden_size, input_size), jnp.float32, -bound1, bound1)
    b1 = jax.random.uniform(k2, (hidden_size,), jnp.float32, -bound1, bound1)
    w2 = jax.random.uniform(k3, (output_size, hidden_size), jnp.float32, -bound2, bound2)
    b2 = jax.random.uniform(k4, (output_size,), jnp.float32, -bound2, bound2)
    return (w1.T, b1.reshape(1, hidden_size), w2.T, b2.reshape(1, output_size))


if __name__ == "__main__":
    input_size, hidden_size, output_size = 16, 32, 4
    batch = 2

    key = jax.random.PRNGKey(0)
    kx, kp = jax.random.split(key)
    x = jax.random.normal(kx, (batch, input_size), jnp.float32)
    w1_t, b1, w2_t, b2 = init_params(kp, input_size, hidden_size, output_size)

    out = linear_qnet_forward(x, w1_t, b1, w2_t, b2)
    out = jax.block_until_ready(out)
    assert out.shape == (batch, output_size)

    # Reference matching the kernel's numerics (bf16 operands, f32 accumulate).
    xb = x.astype(jnp.bfloat16).astype(jnp.float32)
    w1b = w1_t.astype(jnp.bfloat16).astype(jnp.float32)
    w2b = w2_t.astype(jnp.bfloat16).astype(jnp.float32)
    h_ref = jnp.maximum(xb @ w1b + b1, 0.0)
    ref_bf16 = h_ref.astype(jnp.bfloat16).astype(jnp.float32) @ w2b + b2
    assert jnp.allclose(out, ref_bf16, atol=2e-2, rtol=2e-2)

    # Sanity vs. the pure-f32 PyTorch-equivalent forward (loose tolerance for bf16 cast).
    ref_f32 = jnp.maximum(x @ w1_t + b1, 0.0) @ w2_t + b2
    assert jnp.allclose(out, ref_f32, atol=5e-2, rtol=5e-2)

    # Also exercise a larger, tiled batch (multiple grid steps, pipelined x/out tiles).
    big_B = 1024
    xb_big = jax.random.normal(jax.random.PRNGKey(1), (big_B, input_size), jnp.float32)
    out_big = jax.block_until_ready(
        linear_qnet_forward(xb_big, w1_t, b1, w2_t, b2, block_b=512))
    assert out_big.shape == (big_B, output_size)

    print("KERNEL_OK")
</pallas_src>

<mosaic_0001>
module attributes {stable_mosaic.version = 11 : i64} {
  func.func @_mlp_kernel(%arg0: i32, %arg1: memref<8x16xbf16, #tpu.memory_space<vmem>>, %arg2: memref<16x128xbf16, #tpu.memory_space<vmem>>, %arg3: memref<1x128xf32, #tpu.memory_space<vmem>>, %arg4: memref<128x128xbf16, #tpu.memory_space<vmem>>, %arg5: memref<1x128xf32, #tpu.memory_space<vmem>>, %arg6: memref<8x128xf32, #tpu.memory_space<vmem>>) attributes {dimension_semantics = [#tpu.dimension_semantics<parallel>], iteration_bounds = array<i64: 1>, scalar_prefetch = 0 : i64, scratch_operands = 0 : i64, tpu.core_type = #tpu.core_type<tc>, window_params = [{transform_indices = @transform_0, window_bounds = array<i64: 8, 16>}, {pipeline_mode = #tpu.pipeline_mode<synchronous>, transform_indices = @transform_1, window_bounds = array<i64: 16, 128>}, {pipeline_mode = #tpu.pipeline_mode<synchronous>, transform_indices = @transform_2, window_bounds = array<i64: 1, 128>}, {pipeline_mode = #tpu.pipeline_mode<synchronous>, transform_indices = @transform_3, window_bounds = array<i64: 128, 128>}, {pipeline_mode = #tpu.pipeline_mode<synchronous>, transform_indices = @transform_4, window_bounds = array<i64: 1, 128>}, {transform_indices = @transform_5, window_bounds = array<i64: 8, 128>}]} {
    %c0 = arith.constant 0 : index
    %c0_0 = arith.constant 0 : index
    %0 = vector.load %arg1[%c0, %c0_0] : memref<8x16xbf16, #tpu.memory_space<vmem>>, vector<8x16xbf16>
    %c0_1 = arith.constant 0 : index
    %c0_2 = arith.constant 0 : index
    %1 = vector.load %arg2[%c0_1, %c0_2] : memref<16x128xbf16, #tpu.memory_space<vmem>>, vector<16x128xbf16>
    %cst = arith.constant dense<0.000000e+00> : vector<8x128xf32>
    %2 = tpu.matmul %0, %1, %cst {dimension_numbers = #tpu.dot_dimension_numbers<[1], [0], [0], [1], [0, 0, 1, 1], [], []>} : vector<8x16xbf16>, vector<16x128xbf16>, vector<8x128xf32> -> vector<8x128xf32>
    %c0_3 = arith.constant 0 : index
    %c0_4 = arith.constant 0 : index
    %3 = vector.load %arg3[%c0_3, %c0_4] : memref<1x128xf32, #tpu.memory_space<vmem>>, vector<1x128xf32>
    %4 = vector.broadcast %3 : vector<1x128xf32> to vector<8x128xf32>
    %5 = arith.addf %2, %4 : vector<8x128xf32>
    %cst_5 = arith.constant 0.000000e+00 : f32
    %6 = vector.broadcast %cst_5 : f32 to vector<8x128xf32>
    %7 = arith.maximumf %5, %6 : vector<8x128xf32>
    %8 = arith.truncf %7 : vector<8x128xf32> to vector<8x128xbf16>
    %c0_6 = arith.constant 0 : index
    %c0_7 = arith.constant 0 : index
    %9 = vector.load %arg4[%c0_6, %c0_7] : memref<128x128xbf16, #tpu.memory_space<vmem>>, vector<128x128xbf16>
    %cst_8 = arith.constant dense<0.000000e+00> : vector<8x128xf32>
    %10 = tpu.matmul %8, %9, %cst_8 {dimension_numbers = #tpu.dot_dimension_numbers<[1], [0], [0], [1], [0, 0, 1, 1], [], []>} : vector<8x128xbf16>, vector<128x128xbf16>, vector<8x128xf32> -> vector<8x128xf32>
    %c0_9 = arith.constant 0 : index
    %c0_10 = arith.constant 0 : index
    %11 = vector.load %arg5[%c0_9, %c0_10] : memref<1x128xf32, #tpu.memory_space<vmem>>, vector<1x128xf32>
    %12 = vector.broadcast %11 : vector<1x128xf32> to vector<8x128xf32>
    %13 = arith.addf %10, %12 : vector<8x128xf32>
    %c0_11 = arith.constant 0 : index
    %c0_12 = arith.constant 0 : index
    %14 = vector.load %arg6[%c0_11, %c0_12] : memref<8x128xf32, #tpu.memory_space<vmem>>, vector<8x128xf32>
    tpu.vector_store %arg6[%c0_11, %c0_12], %13 {strides = array<i32>} : memref<8x128xf32, #tpu.memory_space<vmem>>, vector<8x128xf32>,
    return
  }
  func.func @transform_0(%arg0: i32) -> (i32, i32) {
    %c0_i32 = arith.constant 0 : i32
    %c0_i32_0 = arith.constant 0 : i32
    return %arg0, %c0_i32 : i32, i32
  }
  func.func @transform_1(%arg0: i32) -> (i32, i32) {
    %c0_i32 = arith.constant 0 : i32
    %c0_i32_0 = arith.constant 0 : i32
    %c0_i32_1 = arith.constant 0 : i32
    return %c0_i32, %c0_i32_0 : i32, i32
  }
  func.func @transform_2(%arg0: i32) -> (i32, i32) {
    %c0_i32 = arith.constant 0 : i32
    %c0_i32_0 = arith.constant 0 : i32
    %c0_i32_1 = arith.constant 0 : i32
    return %c0_i32, %c0_i32_0 : i32, i32
  }
  func.func @transform_3(%arg0: i32) -> (i32, i32) {
    %c0_i32 = arith.constant 0 : i32
    %c0_i32_0 = arith.constant 0 : i32
    %c0_i32_1 = arith.constant 0 : i32
    return %c0_i32, %c0_i32_0 : i32, i32
  }
  func.func @transform_4(%arg0: i32) -> (i32, i32) {
    %c0_i32 = arith.constant 0 : i32
    %c0_i32_0 = arith.constant 0 : i32
    %c0_i32_1 = arith.constant 0 : i32
    return %c0_i32, %c0_i32_0 : i32, i32
  }
  func.func @transform_5(%arg0: i32) -> (i32, i32) {
    %c0_i32 = arith.constant 0 : i32
    %c0_i32_0 = arith.constant 0 : i32
    return %arg0, %c0_i32 : i32, i32
  }
}

</mosaic_0001>

<llo_original>
// kernel: linear_qnet_forward.1
$region0: #{linear_qnet_forward.1}
  #allocation0 [shape = 'u32[]', space=smem, size = 0x4, offset = 0x4, fixed_abs, tag = 'smem constant byte address 0x4 - core index']
  #allocation1 [shape = 'u32[144,128]{1,0:T(1,128)}', space=vmem, size = 0x12000, scoped, tag = 'internal scratch']
  %s0 = inlined_call_operand.vmem [shape: bf16[8,16], index: 0, kind: input, shape index: {}]
  %s1 = inlined_call_operand.vmem [shape: bf16[16,128], index: 1, kind: input, shape index: {}]
  %s2 = inlined_call_operand.vmem [shape: f32[1,128], index: 2, kind: input, shape index: {}]
  %s3 = inlined_call_operand.vmem [shape: bf16[128,128], index: 3, kind: input, shape index: {}]
  %s4 = inlined_call_operand.vmem [shape: f32[1,128], index: 4, kind: input, shape index: {}]
  %s5 = inlined_call_operand.vmem [shape: f32[8,128], index: 5, kind: output, shape index: {}]
  %s6 = sld [smem:[#allocation0]]
  $region30: #{linear_qnet_forward.1} parent=0
    _
  %s8 = ssub.s32 1, %s6
  %s9 = scalar_select 0, %s8, %s6
  // Predicated region
  $region2: #{linear_qnet_forward.1} parent=0 // pred_check
    _
  $region3: #{linear_qnet_forward.1} parent=0 // pred_check_branch
    %11 = sbr.rel (0) target = $region5
  $region4: #{linear_qnet_forward.1} parent=0 // pred_region
    _
  $region5: #{linear_qnet_forward.1} parent=0 // pred_fallthru
    _
  // Predicated region
  $region6: #{linear_qnet_forward.1} parent=0 // pred_check
    _
  $region7: #{linear_qnet_forward.1} parent=0 // pred_check_branch
    %13 = sbr.rel (0) target = $region9
  $region8: #{linear_qnet_forward.1} parent=0 // pred_region
    _
  $region9: #{linear_qnet_forward.1} parent=0 // pred_fallthru
    _
  // Predicated region
  $region10: #{linear_qnet_forward.1} parent=0 // pred_check
    _
  $region11: #{linear_qnet_forward.1} parent=0 // pred_check_branch
    %15 = sbr.rel (0) target = $region13
  $region12: #{linear_qnet_forward.1} parent=0 // pred_region
    _
  $region13: #{linear_qnet_forward.1} parent=0 // pred_fallthru
    _
  // Predicated region
  $region14: #{linear_qnet_forward.1} parent=0 // pred_check
    _
  $region15: #{linear_qnet_forward.1} parent=0 // pred_check_branch
    %17 = sbr.rel (0) target = $region17
  $region16: #{linear_qnet_forward.1} parent=0 // pred_region
    _
  $region17: #{linear_qnet_forward.1} parent=0 // pred_fallthru
    _
  // Predicated region
  $region18: #{linear_qnet_forward.1} parent=0 // pred_check
    _
  $region19: #{linear_qnet_forward.1} parent=0 // pred_check_branch
    %19 = sbr.rel (0) target = $region21
  $region20: #{linear_qnet_forward.1} parent=0 // pred_region
    _
  $region21: #{linear_qnet_forward.1} parent=0 // pred_fallthru
    _
  %v21 = vld [vmem:[%s0] sm:$0xf]
  %v22 = vld [vmem:[%s1] sm:$0xf]
  %v23 = vld [vmem:[%s1 + $0x4] sm:$0xf]
  %v24 = vld [vmem:[%s2] sm:$0x1]
  %v26 = vlaneseq
  %v27 = vshrl.u32 %v26, 7
  %v28 = vsub.s32 0, %v27
  %v29 = vrot.slane %v24, %v28
  %v33 = vunpack.c.l.b16 %v22
  %v34 = vunpack.c.l.b16 %v23
  %v35 = vpack.c.b16 %v34, %v33
  %vm37 = vcmask 130048
  %v39 = vsel %vm37, %v21, 0
  %41 = vmatprep.subr.bf16.mxu0 0
  %42 = vmatpush1.bf16.msra.mxu0 %v35
  %43 = vmatprep.subr.bf16.mxu0 0
  %44 = vmatpush1.bf16.msra.mxu0 0
  %45 = vmatprep.subr.bf16.mxu0 0
  %46 = vmatpush1.bf16.msra.mxu0 0
  %47 = vmatprep.subr.bf16.mxu0 0
  %48 = vmatpush1.bf16.msra.mxu0 0
  %49 = vmatprep.subr.bf16.mxu0 0
  %50 = vmatpush1.bf16.msra.mxu0 0
  %51 = vmatprep.subr.bf16.mxu0 0
  %52 = vmatpush1.bf16.msra.mxu0 0
  %53 = vmatprep.subr.bf16.mxu0 0
  %54 = vmatpush1.bf16.msra.mxu0 0
  %55 = vmatprep.subr.bf16.mxu0 0
  %56 = vmatpush1.bf16.msra.mxu0 0
  %57 = vmatprep.subr.bf16.mxu0 0
  %58 = vmatpush1.bf16.msra.mxu0 0
  %59 = vmatprep.subr.bf16.mxu0 0
  %60 = vmatpush1.bf16.msra.mxu0 0
  %61 = vmatprep.subr.bf16.mxu0 0
  %62 = vmatpush1.bf16.msra.mxu0 0
  %63 = vmatprep.subr.bf16.mxu0 0
  %64 = vmatpush1.bf16.msra.mxu0 0
  %65 = vmatprep.subr.bf16.mxu0 0
  %66 = vmatpush1.bf16.msra.mxu0 0
  %67 = vmatprep.subr.bf16.mxu0 0
  %68 = vmatpush1.bf16.msra.mxu0 0
  %69 = vmatprep.subr.bf16.mxu0 0
  %70 = vmatpush1.bf16.msra.mxu0 0
  %71 = vmatprep.subr.bf16.mxu0 0
  %72 = vmatpush1.bf16.msra.mxu0 0
  %73 = vmatprep.mubr.bf16.mxu0 0
  %74 = vmatmul.mubr.bf16.gmra.mrb[0].mxu0 %v39
  %v75 = vpop.f32.mrb[0].mxu0
  %v76 = vadd.f32 %v29, %v75
  %v77 = vpop.f32.mrb[0].mxu0
  %v78 = vpop.f32.mrb[0].mxu0
  %v79 = vpop.f32.mrb[0].mxu0
  %80 = vdwg.mxu0
  %v81 = vmax.f32 %v76, 0.0
  %v82 = vpack.c.bf16 %v81, %v81
  %v83 = vld [vmem:[%s3] sm:$0xf]
  %v84 = vld [vmem:[%s3 + $0x4] sm:$0xf]
  %v85 = vld [vmem:[%s3 + $0x8] sm:$0xf]
  %v86 = vld [vmem:[%s3 + $0xc] sm:$0xf]
  %v87 = vld [vmem:[%s3 + $0x10] sm:$0xf]
  %v88 = vld [vmem:[%s3 + $0x14] sm:$0xf]
  %v89 = vld [vmem:[%s3 + $0x18] sm:$0xf]
  %v90 = vld [vmem:[%s3 + $0x1c] sm:$0xf]
  %v91 = vld [vmem:[%s3 + $0x20] sm:$0xf]
  %v92 = vld [vmem:[%s3 + $0x24] sm:$0xf]
  %v93 = vld [vmem:[%s3 + $0x28] sm:$0xf]
  %v94 = vld [vmem:[%s3 + $0x2c] sm:$0xf]
  %v95 = vld [vmem:[%s3 + $0x30] sm:$0xf]
  %v96 = vld [vmem:[%s3 + $0x34] sm:$0xf]
  %v97 = vld [vmem:[%s3 + $0x38] sm:$0xf]
  %v98 = vld [vmem:[%s3 + $0x3c] sm:$0xf]
  %v99 = vld [vmem:[%s4] sm:$0x1]
  %v101 = vlaneseq
  %v102 = vshrl.u32 %v101, 7
  %v103 = vsub.s32 0, %v102
  %v104 = vrot.slane %v99, %v103
  %v122 = vunpack.c.l.b16 %v83
  %v123 = vunpack.c.l.b16 %v84
  %v124 = vunpack.c.l.b16 %v85
  %v125 = vunpack.c.l.b16 %v86
  %v126 = vunpack.c.l.b16 %v87
  %v127 = vunpack.c.l.b16 %v88
  %v128 = vunpack.c.l.b16 %v89
  %v129 = vunpack.c.l.b16 %v90
  %v130 = vunpack.c.l.b16 %v91
  %v131 = vunpack.c.l.b16 %v92
  %v132 = vunpack.c.l.b16 %v93
  %v133 = vunpack.c.l.b16 %v94
  %v134 = vunpack.c.l.b16 %v95
  %v135 = vunpack.c.l.b16 %v96
  %v136 = vunpack.c.l.b16 %v97
  %v137 = vunpack.c.l.b16 %v98
  %v138 = vpack.c.b16 %v123, %v122
  %v139 = vpack.c.b16 %v125, %v124
  %v140 = vpack.c.b16 %v127, %v126
  %v141 = vpack.c.b16 %v129, %v128
  %v142 = vpack.c.b16 %v131, %v130
  %v143 = vpack.c.b16 %v133, %v132
  %v144 = vpack.c.b16 %v135, %v134
  %v145 = vpack.c.b16 %v137, %v136
  %154 = vmatprep.subr.bf16.mxu0 0
  %155 = vmatpush1.bf16.msra.mxu0 %v138
  %156 = vmatprep.subr.bf16.mxu0 0
  %157 = vmatpush1.bf16.msra.mxu0 %v139
  %158 = vmatprep.subr.bf16.mxu0 0
  %159 = vmatpush1.bf16.msra.mxu0 %v140
  %160 = vmatprep.subr.bf16.mxu0 0
  %161 = vmatpush1.bf16.msra.mxu0 %v141
  %162 = vmatprep.subr.bf16.mxu0 0
  %163 = vmatpush1.bf16.msra.mxu0 %v142
  %164 = vmatprep.subr.bf16.mxu0 0
  %165 = vmatpush1.bf16.msra.mxu0 %v143
  %166 = vmatprep.subr.bf16.mxu0 0
  %167 = vmatpush1.bf16.msra.mxu0 %v144
  %168 = vmatprep.subr.bf16.mxu0 0
  %169 = vmatpush1.bf16.msra.mxu0 %v145
  %170 = vmatprep.subr.bf16.mxu0 0
  %171 = vmatpush1.bf16.msra.mxu0 0
  %172 = vmatprep.subr.bf16.mxu0 0
  %173 = vmatpush1.bf16.msra.mxu0 0
  %174 = vmatprep.subr.bf16.mxu0 0
  %175 = vmatpush1.bf16.msra.mxu0 0
  %176 = vmatprep.subr.bf16.mxu0 0
  %177 = vmatpush1.bf16.msra.mxu0 0
  %178 = vmatprep.subr.bf16.mxu0 0
  %179 = vmatpush1.bf16.msra.mxu0 0
  %180 = vmatprep.subr.bf16.mxu0 0
  %181 = vmatpush1.bf16.msra.mxu0 0
  %182 = vmatprep.subr.bf16.mxu0 0
  %183 = vmatpush1.bf16.msra.mxu0 0
  %184 = vmatprep.subr.bf16.mxu0 0
  %185 = vmatpush1.bf16.msra.mxu0 0
  %186 = vmatprep.mubr.bf16.mxu0 0
  %187 = vmatmul.mubr.bf16.gmra.mrb[0].mxu0 %v82
  %v188 = vpop.f32.mrb[0].mxu0
  %v189 = vadd.f32 %v104, %v188
  %v190 = vpop.f32.mrb[0].mxu0
  %v191 = vpop.f32.mrb[0].mxu0
  %v192 = vpop.f32.mrb[0].mxu0
  %193 = vdwg.mxu0
  %194 = vst [vmem:[%s5] sm:$0xff] %v189
  // Predicated region
  $region22: #{linear_qnet_forward.1} parent=0 // pred_check
    _
  $region23: #{linear_qnet_forward.1} parent=0 // pred_check_branch
    %196 = sbr.rel (0) target = $region25
  $region24: #{linear_qnet_forward.1} parent=0 // pred_region
    _
  $region25: #{linear_qnet_forward.1} parent=0 // pred_fallthru
    _
  // Predicated region
  $region26: #{linear_qnet_forward.1} parent=0 // pred_check
    _
  $region27: #{linear_qnet_forward.1} parent=0 // pred_check_branch
    %198 = sbr.rel (0) target = $region29
  $region28: #{linear_qnet_forward.1} parent=0 // pred_region
    _
  $region29: #{linear_qnet_forward.1} parent=0 // pred_fallthru
    _

</llo_original>
